<compile_context>
chip_gen: v7x
topology: tpu7x:2x2x1
jax: 0.10.0
libtpu: 0.0.40
codegen_flags: <defaults>
</compile_context>

<pallas_src>
import functools

import jax
import jax.numpy as jnp
from jax import lax
from jax.experimental import pallas as pl
from jax.experimental.pallas import tpu as pltpu

BN_EPS = 1e-5
LANE = 128
N_CLASSES = 4
BLOCK_B = 2048         # max batch-tile rows per grid step (review: 2048-4096)
X_LANES = 16           # raw features padded 9 -> 16 lanes (64 B/row)
OUT_PAD = 8            # logits padded 4 -> 8 lanes (32 B/row, masked store)
TAB_PAD = 128          # stacked embedding-table rows, padded to 128

EMB_SIZES = (22, 22, 4, 2, 2, 2, 5)            # nn.Embedding sizes, cols 2..8
_offs, _acc = [], 0
for _n in EMB_SIZES:
    _offs.append(_acc)
    _acc += _n
TAB_OFFSETS = tuple(_offs)                     # (0, 22, 44, 48, 50, 52, 54)
assert _acc <= TAB_PAD


def _round_up(x, m):
    return (x + m - 1) // m * m


# ----------------------------------------------------------------------------
# Pallas kernel: fused embeddings + folded hidden stack + final narrow Linear
# ----------------------------------------------------------------------------
def _fnn_fused_kernel(x_ref, el_ref, tab_ref, w_ref, b_ref, wf_ref, bf_ref,
                      out_ref, *, n_layers):
    """
    x_ref  : (TB, 16)   f32  raw features (cols 0-1 continuous, 2-8 categorical)
    el_ref : (8, D)     f32  rows: embed_1 weight, embed_2 weight, shared bias
    tab_ref: (128, D)   f32  stacked embedding tables (row offsets TAB_OFFSETS)
    w_ref  : (L, D, D)  bf16 folded (Linear+BN) hidden weights, stacked
    b_ref  : (L, 1, D)  f32  folded hidden biases, stacked
    wf_ref : (D, 8)     bf16 final Linear weight (pre-transposed, narrow-padded)
    bf_ref : (1, 8)     f32  final Linear bias (narrow-padded)
    out_ref: (TB, 8)    f32  logits (first 4 lanes valid)
    """
    x = x_ref[...]
    tb = x.shape[0]

    # -- continuous embeddings: exact f32, matches nn.Linear(1, in_dim) x 2 --
    z = (x[:, 0:1] * el_ref[0:1, :]
         + x[:, 1:2] * el_ref[1:2, :]
         + el_ref[2:3, :])                                   # (TB, D) f32

    # -- categorical embeddings: one multi-hot MXU gather over stacked tables --
    iota = lax.broadcasted_iota(jnp.int32, (tb, TAB_PAD), 1)
    multi = None
    for j, off in enumerate(TAB_OFFSETS):                    # static unroll (7)
        idx = x[:, 2 + j:3 + j].astype(jnp.int32) + off      # (TB, 1)
        hot = iota == idx                                    # (TB, 128) one-hot
        multi = hot if multi is None else (multi | hot)      # disjoint ranges
    z = z + jnp.dot(multi.astype(jnp.float32), tab_ref[...],
                    preferred_element_type=jnp.float32)

    # -- hidden stack: relu(h @ W' + b'); BN folded in, Dropout = identity --
    h = z.astype(jnp.bfloat16)
    for l in range(n_layers):                                # static unroll (3 or 6)
        acc = jnp.dot(h, w_ref[l], preferred_element_type=jnp.float32) + b_ref[l]
        h = jnp.maximum(acc, 0.0).astype(jnp.bfloat16)       # f32 epilogue (v5e-safe)

    # -- final Linear(n_hidden, 4): narrow 8-lane output write --
    out_ref[...] = (jnp.dot(h, wf_ref[...], preferred_element_type=jnp.float32)
                    + bf_ref[...])


# ----------------------------------------------------------------------------
# Parameter construction (PyTorch layout) and one-time folding / padding
# ----------------------------------------------------------------------------
def init_params(key, in_dim, n_hidden, flag):
    """Deterministic synthetic parameters matching the PyTorch module's shapes."""
    keys = jax.random.split(key, 32)
    ki = iter(keys)
    p = {}

    # nn.Linear(1, in_dim) x 2
    p["embed_1_w"] = jax.random.normal(next(ki), (in_dim, 1), jnp.float32) * 0.1
    p["embed_1_b"] = jax.random.normal(next(ki), (in_dim,), jnp.float32) * 0.01
    p["embed_2_w"] = jax.random.normal(next(ki), (in_dim, 1), jnp.float32) * 0.1
    p["embed_2_b"] = jax.random.normal(next(ki), (in_dim,), jnp.float32) * 0.01

    # nn.Embedding tables (num_embeddings, in_dim)
    for i, n in enumerate(EMB_SIZES, start=3):
        p[f"embed_{i}_t"] = jax.random.normal(next(ki), (n, in_dim), jnp.float32) * 0.1

    # hidden layers: Linear + BatchNorm params (BN at PyTorch eval defaults)
    n_layers = 6 if flag else 3
    hidden = []
    for l in range(n_layers):
        fan_in = in_dim if l == 0 else n_hidden
        w = jax.random.normal(next(ki), (n_hidden, fan_in), jnp.float32) * 0.1
        b = jax.random.normal(next(ki), (n_hidden,), jnp.float32) * 0.01
        gamma = jnp.ones((n_hidden,), jnp.float32)
        beta = jnp.zeros((n_hidden,), jnp.float32)
        mean = jnp.zeros((n_hidden,), jnp.float32)
        var = jnp.ones((n_hidden,), jnp.float32)
        hidden.append((w, b, gamma, beta, mean, var))
    p["hidden"] = hidden

    # final nn.Linear(n_hidden, 4)
    p["final_w"] = jax.random.normal(next(ki), (N_CLASSES, n_hidden), jnp.float32) * 0.1
    p["final_b"] = jax.random.normal(next(ki), (N_CLASSES,), jnp.float32) * 0.01
    return p


def prepare_params(params):
    """Fold eval-mode BN into the Linears, stack/pad everything once (outside jit)."""
    in_dim = params["embed_1_w"].shape[0]
    hidden = params["hidden"]
    L = len(hidden)
    n_hidden = hidden[0][0].shape[0]
    n_out = params["final_w"].shape[0]

    d_pad = _round_up(max(in_dim, n_hidden), LANE)

    # hidden stack: fold BN (running stats) into Linear, pad to d_pad, stack
    w_stack = jnp.zeros((L, d_pad, d_pad), jnp.float32)
    b_stack = jnp.zeros((L, 1, d_pad), jnp.float32)
    for l, (w, b, g, beta, mean, var) in enumerate(hidden):
        scale = g * lax.rsqrt(var + BN_EPS)                  # [out]
        w_f = w.T * scale[None, :]                           # [in, out]
        b_f = (b - mean) * scale + beta                      # [out]
        w_stack = w_stack.at[l, :w_f.shape[0], :w_f.shape[1]].set(w_f)
        b_stack = b_stack.at[l, 0, :b_f.shape[0]].set(b_f)

    # final Linear, narrow-padded (OUT_PAD = 8 lanes)
    wf = jnp.zeros((d_pad, OUT_PAD), jnp.float32).at[:n_hidden, :n_out].set(
        params["final_w"].T)
    bf = jnp.zeros((1, OUT_PAD), jnp.float32).at[0, :n_out].set(params["final_b"])

    # continuous-embedding rows + shared bias row
    emb_lin = jnp.zeros((8, d_pad), jnp.float32)
    emb_lin = emb_lin.at[0, :in_dim].set(params["embed_1_w"][:, 0])
    emb_lin = emb_lin.at[1, :in_dim].set(params["embed_2_w"][:, 0])
    emb_lin = emb_lin.at[2, :in_dim].set(params["embed_1_b"] + params["embed_2_b"])

    # stacked categorical embedding tables (row layout matches TAB_OFFSETS)
    tab = jnp.zeros((TAB_PAD, d_pad), jnp.float32)
    for j, off in enumerate(TAB_OFFSETS):
        t = params[f"embed_{j + 3}_t"]
        tab = tab.at[off:off + t.shape[0], :in_dim].set(t)

    return {
        "w_stack": w_stack.astype(jnp.bfloat16),   # MXU operands in bf16
        "b_stack": b_stack,                        # biases stay f32
        "wf": wf.astype(jnp.bfloat16),
        "bf": bf,
        "emb_lin": emb_lin,                        # f32 for exact embedding math
        "tab": tab,
    }


# ----------------------------------------------------------------------------
# Forward pass
# ----------------------------------------------------------------------------
@jax.jit
def fnn_forward(x, prep):
    """x: [B, 9] float32; columns 0-1 continuous, columns 2-8 categorical indices."""
    B = x.shape[0]
    L, d_pad, _ = prep["w_stack"].shape

    # batch tiling: >= 2 blocks when B > 8 so both v7x TensorCores get work;
    # tile rows capped at BLOCK_B (per-step overhead amortization), multiple of 8
    if B <= 8:
        n_blocks = 1
    else:
        n_blocks = max(2, -(-B // BLOCK_B))
    tb = _round_up(-(-B // n_blocks), 8)
    b_pad = tb * n_blocks

    # only per-row HBM input: raw features lane-padded 9 -> 16 (64 B/row)
    x16 = jnp.zeros((b_pad, X_LANES), jnp.float32)
    x16 = x16.at[:B, :x.shape[1]].set(x.astype(jnp.float32))

    const2 = lambda i: (0, 0)     # resident operands (never change across grid)
    const3 = lambda i: (0, 0, 0)

    out = pl.pallas_call(
        functools.partial(_fnn_fused_kernel, n_layers=L),
        out_shape=jax.ShapeDtypeStruct((b_pad, OUT_PAD), jnp.float32),
        grid=(n_blocks,),
        in_specs=[
            pl.BlockSpec((tb, X_LANES), lambda i: (i, 0)),     # streamed per tile
            pl.BlockSpec((8, d_pad), const2),                  # resident
            pl.BlockSpec((TAB_PAD, d_pad), const2),            # resident
            pl.BlockSpec((L, d_pad, d_pad), const3),           # resident
            pl.BlockSpec((L, 1, d_pad), const3),               # resident
            pl.BlockSpec((d_pad, OUT_PAD), const2),            # resident
            pl.BlockSpec((1, OUT_PAD), const2),                # resident
        ],
        out_specs=pl.BlockSpec((tb, OUT_PAD), lambda i: (i, 0)),
        compiler_params=pltpu.CompilerParams(
            dimension_semantics=("parallel",)),
    )(x16, prep["emb_lin"], prep["tab"], prep["w_stack"], prep["b_stack"],
      prep["wf"], prep["bf"])

    return out[:B, :N_CLASSES]


def fnn_reference(x, params):
    """Pure-JAX f32 reference (eval-mode semantics) for validation."""
    z = (x[:, 0:1] * params["embed_1_w"][:, 0][None, :] + params["embed_1_b"][None, :]
         + x[:, 1:2] * params["embed_2_w"][:, 0][None, :] + params["embed_2_b"][None, :])
    for i in range(3, 10):
        idx = x[:, i - 1].astype(jnp.int32)
        z = z + params[f"embed_{i}_t"][idx]
    for (w, b, g, beta, mean, var) in params["hidden"]:
        h = z @ w.T + b
        h = g * (h - mean) * lax.rsqrt(var + BN_EPS) + beta
        z = jnp.maximum(h, 0.0)
    return z @ params["final_w"].T + params["final_b"]


if __name__ == "__main__":
    B, IN_DIM, N_HIDDEN, FLAG = 8, 32, 32, True

    key = jax.random.PRNGKey(0)
    k_param, k_c0, k_c1, *k_cat = jax.random.split(key, 11)

    params = init_params(k_param, IN_DIM, N_HIDDEN, FLAG)
    prep = prepare_params(params)

    # build input x: [B, 9]; cols 0,1 continuous; cols 2..8 indices in valid ranges
    cont0 = jax.random.uniform(k_c0, (B, 1), jnp.float32)
    cont1 = jax.random.uniform(k_c1, (B, 1), jnp.float32)
    cats = [
        jax.random.randint(k_cat[i], (B, 1), 0, n).astype(jnp.float32)
        for i, n in enumerate(EMB_SIZES)
    ]
    x = jnp.concatenate([cont0, cont1] + cats, axis=1)

    out = fnn_forward(x, prep)
    jax.block_until_ready(out)

    assert out.shape == (B, N_CLASSES) and out.dtype == jnp.float32
    ref = fnn_reference(x, params)
    max_err = float(jnp.max(jnp.abs(out - ref)))
    # scale-aware tolerance (bf16 hidden stack vs f32 reference)
    tol = 2e-2 * max(1.0, float(jnp.max(jnp.abs(ref))))
    assert max_err < tol, f"mismatch vs reference: {max_err} (tol {tol})"
    print("KERNEL_OK")
</pallas_src>

<mosaic_0001>
module attributes {stable_mosaic.version = 11 : i64} {
  func.func @_fnn_fused_kernel(%arg0: i32, %arg1: memref<8x16xf32, #tpu.memory_space<vmem>>, %arg2: memref<8x128xf32, #tpu.memory_space<vmem>>, %arg3: memref<128x128xf32, #tpu.memory_space<vmem>>, %arg4: memref<6x128x128xbf16, #tpu.memory_space<vmem>>, %arg5: memref<6x1x128xf32, #tpu.memory_space<vmem>>, %arg6: memref<128x8xbf16, #tpu.memory_space<vmem>>, %arg7: memref<1x8xf32, #tpu.memory_space<vmem>>, %arg8: memref<8x8xf32, #tpu.memory_space<vmem>>) attributes {dimension_semantics = [#tpu.dimension_semantics<parallel>], iteration_bounds = array<i64: 1>, scalar_prefetch = 0 : i64, scratch_operands = 0 : i64, tpu.core_type = #tpu.core_type<tc>, window_params = [{transform_indices = @transform_0, window_bounds = array<i64: 8, 16>}, {pipeline_mode = #tpu.pipeline_mode<synchronous>, transform_indices = @transform_1, window_bounds = array<i64: 8, 128>}, {pipeline_mode = #tpu.pipeline_mode<synchronous>, transform_indices = @transform_2, window_bounds = array<i64: 128, 128>}, {pipeline_mode = #tpu.pipeline_mode<synchronous>, transform_indices = @transform_3, window_bounds = array<i64: 6, 128, 128>}, {pipeline_mode = #tpu.pipeline_mode<synchronous>, transform_indices = @transform_4, window_bounds = array<i64: 6, 1, 128>}, {pipeline_mode = #tpu.pipeline_mode<synchronous>, transform_indices = @transform_5, window_bounds = array<i64: 128, 8>}, {pipeline_mode = #tpu.pipeline_mode<synchronous>, transform_indices = @transform_6, window_bounds = array<i64: 1, 8>}, {transform_indices = @transform_7, window_bounds = array<i64: 8, 8>}]} {
    %c0 = arith.constant 0 : index
    %c0_0 = arith.constant 0 : index
    %0 = vector.load %arg1[%c0, %c0_0] : memref<8x16xf32, #tpu.memory_space<vmem>>, vector<8x16xf32>
    %1 = vector.extract_strided_slice %0 {offsets = [0, 0], sizes = [8, 1], strides = [1, 1]} : vector<8x16xf32> to vector<8x1xf32>
    %c0_1 = arith.constant 0 : index
    %c0_2 = arith.constant 0 : index
    %2 = vector.load %arg2[%c0_1, %c0_2] : memref<8x128xf32, #tpu.memory_space<vmem>>, vector<1x128xf32>
    %3 = vector.broadcast %1 : vector<8x1xf32> to vector<8x128xf32>
    %4 = vector.broadcast %2 : vector<1x128xf32> to vector<8x128xf32>
    %5 = arith.mulf %3, %4 : vector<8x128xf32>
    %6 = vector.extract_strided_slice %0 {offsets = [0, 1], sizes = [8, 1], strides = [1, 1]} : vector<8x16xf32> to vector<8x1xf32>
    %c1 = arith.constant 1 : index
    %c0_3 = arith.constant 0 : index
    %7 = vector.load %arg2[%c1, %c0_3] : memref<8x128xf32, #tpu.memory_space<vmem>>, vector<1x128xf32>
    %8 = vector.broadcast %6 : vector<8x1xf32> to vector<8x128xf32>
    %9 = vector.broadcast %7 : vector<1x128xf32> to vector<8x128xf32>
    %10 = arith.mulf %8, %9 : vector<8x128xf32>
    %11 = arith.addf %5, %10 : vector<8x128xf32>
    %c2 = arith.constant 2 : index
    %c0_4 = arith.constant 0 : index
    %12 = vector.load %arg2[%c2, %c0_4] : memref<8x128xf32, #tpu.memory_space<vmem>>, vector<1x128xf32>
    %13 = vector.broadcast %12 : vector<1x128xf32> to vector<8x128xf32>
    %14 = arith.addf %11, %13 : vector<8x128xf32>
    %15 = tpu.iota {dimensions = array<i32: 1>} : vector<8x128xi32>
    %16 = vector.extract_strided_slice %0 {offsets = [0, 2], sizes = [8, 1], strides = [1, 1]} : vector<8x16xf32> to vector<8x1xf32>
    %17 = arith.fptosi %16 : vector<8x1xf32> to vector<8x1xi32>
    %c0_i32 = arith.constant 0 : i32
    %18 = vector.broadcast %c0_i32 : i32 to vector<8x1xi32>
    %19 = arith.addi %17, %18 : vector<8x1xi32>
    %20 = vector.broadcast %19 : vector<8x1xi32> to vector<8x128xi32>
    %21 = arith.cmpi eq, %15, %20 : vector<8x128xi32>
    %22 = vector.extract_strided_slice %0 {offsets = [0, 3], sizes = [8, 1], strides = [1, 1]} : vector<8x16xf32> to vector<8x1xf32>
    %23 = arith.fptosi %22 : vector<8x1xf32> to vector<8x1xi32>
    %c22_i32 = arith.constant 22 : i32
    %24 = vector.broadcast %c22_i32 : i32 to vector<8x1xi32>
    %25 = arith.addi %23, %24 : vector<8x1xi32>
    %26 = vector.broadcast %25 : vector<8x1xi32> to vector<8x128xi32>
    %27 = arith.cmpi eq, %15, %26 : vector<8x128xi32>
    %28 = arith.ori %21, %27 : vector<8x128xi1>
    %29 = vector.extract_strided_slice %0 {offsets = [0, 4], sizes = [8, 1], strides = [1, 1]} : vector<8x16xf32> to vector<8x1xf32>
    %30 = arith.fptosi %29 : vector<8x1xf32> to vector<8x1xi32>
    %c44_i32 = arith.constant 44 : i32
    %31 = vector.broadcast %c44_i32 : i32 to vector<8x1xi32>
    %32 = arith.addi %30, %31 : vector<8x1xi32>
    %33 = vector.broadcast %32 : vector<8x1xi32> to vector<8x128xi32>
    %34 = arith.cmpi eq, %15, %33 : vector<8x128xi32>
    %35 = arith.ori %28, %34 : vector<8x128xi1>
    %36 = vector.extract_strided_slice %0 {offsets = [0, 5], sizes = [8, 1], strides = [1, 1]} : vector<8x16xf32> to vector<8x1xf32>
    %37 = arith.fptosi %36 : vector<8x1xf32> to vector<8x1xi32>
    %c48_i32 = arith.constant 48 : i32
    %38 = vector.broadcast %c48_i32 : i32 to vector<8x1xi32>
    %39 = arith.addi %37, %38 : vector<8x1xi32>
    %40 = vector.broadcast %39 : vector<8x1xi32> to vector<8x128xi32>
    %41 = arith.cmpi eq, %15, %40 : vector<8x128xi32>
    %42 = arith.ori %35, %41 : vector<8x128xi1>
    %43 = vector.extract_strided_slice %0 {offsets = [0, 6], sizes = [8, 1], strides = [1, 1]} : vector<8x16xf32> to vector<8x1xf32>
    %44 = arith.fptosi %43 : vector<8x1xf32> to vector<8x1xi32>
    %c50_i32 = arith.constant 50 : i32
    %45 = vector.broadcast %c50_i32 : i32 to vector<8x1xi32>
    %46 = arith.addi %44, %45 : vector<8x1xi32>
    %47 = vector.broadcast %46 : vector<8x1xi32> to vector<8x128xi32>
    %48 = arith.cmpi eq, %15, %47 : vector<8x128xi32>
    %49 = arith.ori %42, %48 : vector<8x128xi1>
    %50 = vector.extract_strided_slice %0 {offsets = [0, 7], sizes = [8, 1], strides = [1, 1]} : vector<8x16xf32> to vector<8x1xf32>
    %51 = arith.fptosi %50 : vector<8x1xf32> to vector<8x1xi32>
    %c52_i32 = arith.constant 52 : i32
    %52 = vector.broadcast %c52_i32 : i32 to vector<8x1xi32>
    %53 = arith.addi %51, %52 : vector<8x1xi32>
    %54 = vector.broadcast %53 : vector<8x1xi32> to vector<8x128xi32>
    %55 = arith.cmpi eq, %15, %54 : vector<8x128xi32>
    %56 = arith.ori %49, %55 : vector<8x128xi1>
    %57 = vector.extract_strided_slice %0 {offsets = [0, 8], sizes = [8, 1], strides = [1, 1]} : vector<8x16xf32> to vector<8x1xf32>
    %58 = arith.fptosi %57 : vector<8x1xf32> to vector<8x1xi32>
    %c54_i32 = arith.constant 54 : i32
    %59 = vector.broadcast %c54_i32 : i32 to vector<8x1xi32>
    %60 = arith.addi %58, %59 : vector<8x1xi32>
    %61 = vector.broadcast %60 : vector<8x1xi32> to vector<8x128xi32>
    %62 = arith.cmpi eq, %15, %61 : vector<8x128xi32>
    %63 = arith.ori %56, %62 : vector<8x128xi1>
    %64 = arith.extui %63 : vector<8x128xi1> to vector<8x128xi32>
    %65 = arith.sitofp %64 : vector<8x128xi32> to vector<8x128xf32>
    %c0_5 = arith.constant 0 : index
    %c0_6 = arith.constant 0 : index
    %66 = vector.load %arg3[%c0_5, %c0_6] : memref<128x128xf32, #tpu.memory_space<vmem>>, vector<128x128xf32>
    %cst = arith.constant dense<0.000000e+00> : vector<8x128xf32>
    %67 = tpu.matmul %65, %66, %cst {dimension_numbers = #tpu.dot_dimension_numbers<[1], [0], [0], [1], [0, 0, 1, 1], [], []>} : vector<8x128xf32>, vector<128x128xf32>, vector<8x128xf32> -> vector<8x128xf32>
    %68 = arith.addf %14, %67 : vector<8x128xf32>
    %69 = arith.truncf %68 : vector<8x128xf32> to vector<8x128xbf16>
    %c0_7 = arith.constant 0 : index
    %c0_8 = arith.constant 0 : index
    %c0_9 = arith.constant 0 : index
    %70 = vector.load %arg4[%c0_7, %c0_8, %c0_9] : memref<6x128x128xbf16, #tpu.memory_space<vmem>>, vector<1x128x128xbf16>
    %71 = vector.shape_cast %70 : vector<1x128x128xbf16> to vector<128x128xbf16>
    %cst_10 = arith.constant dense<0.000000e+00> : vector<8x128xf32>
    %72 = tpu.matmul %69, %71, %cst_10 {dimension_numbers = #tpu.dot_dimension_numbers<[1], [0], [0], [1], [0, 0, 1, 1], [], []>} : vector<8x128xbf16>, vector<128x128xbf16>, vector<8x128xf32> -> vector<8x128xf32>
    %c0_11 = arith.constant 0 : index
    %c0_12 = arith.constant 0 : index
    %c0_13 = arith.constant 0 : index
    %73 = vector.load %arg5[%c0_11, %c0_12, %c0_13] : memref<6x1x128xf32, #tpu.memory_space<vmem>>, vector<1x1x128xf32>
    %74 = vector.shape_cast %73 : vector<1x1x128xf32> to vector<1x128xf32>
    %75 = vector.broadcast %74 : vector<1x128xf32> to vector<8x128xf32>
    %76 = arith.addf %72, %75 : vector<8x128xf32>
    %cst_14 = arith.constant 0.000000e+00 : f32
    %77 = vector.broadcast %cst_14 : f32 to vector<8x128xf32>
    %78 = arith.maximumf %76, %77 : vector<8x128xf32>
    %79 = arith.truncf %78 : vector<8x128xf32> to vector<8x128xbf16>
    %c1_15 = arith.constant 1 : index
    %c0_16 = arith.constant 0 : index
    %c0_17 = arith.constant 0 : index
    %80 = vector.load %arg4[%c1_15, %c0_16, %c0_17] : memref<6x128x128xbf16, #tpu.memory_space<vmem>>, vector<1x128x128xbf16>
    %81 = vector.shape_cast %80 : vector<1x128x128xbf16> to vector<128x128xbf16>
    %cst_18 = arith.constant dense<0.000000e+00> : vector<8x128xf32>
    %82 = tpu.matmul %79, %81, %cst_18 {dimension_numbers = #tpu.dot_dimension_numbers<[1], [0], [0], [1], [0, 0, 1, 1], [], []>} : vector<8x128xbf16>, vector<128x128xbf16>, vector<8x128xf32> -> vector<8x128xf32>
    %c1_19 = arith.constant 1 : index
    %c0_20 = arith.constant 0 : index
    %c0_21 = arith.constant 0 : index
    %83 = vector.load %arg5[%c1_19, %c0_20, %c0_21] : memref<6x1x128xf32, #tpu.memory_space<vmem>>, vector<1x1x128xf32>
    %84 = vector.shape_cast %83 : vector<1x1x128xf32> to vector<1x128xf32>
    %85 = vector.broadcast %84 : vector<1x128xf32> to vector<8x128xf32>
    %86 = arith.addf %82, %85 : vector<8x128xf32>
    %cst_22 = arith.constant 0.000000e+00 : f32
    %87 = vector.broadcast %cst_22 : f32 to vector<8x128xf32>
    %88 = arith.maximumf %86, %87 : vector<8x128xf32>
    %89 = arith.truncf %88 : vector<8x128xf32> to vector<8x128xbf16>
    %c2_23 = arith.constant 2 : index
    %c0_24 = arith.constant 0 : index
    %c0_25 = arith.constant 0 : index
    %90 = vector.load %arg4[%c2_23, %c0_24, %c0_25] : memref<6x128x128xbf16, #tpu.memory_space<vmem>>, vector<1x128x128xbf16>
    %91 = vector.shape_cast %90 : vector<1x128x128xbf16> to vector<128x128xbf16>
    %cst_26 = arith.constant dense<0.000000e+00> : vector<8x128xf32>
    %92 = tpu.matmul %89, %91, %cst_26 {dimension_numbers = #tpu.dot_dimension_numbers<[1], [0], [0], [1], [0, 0, 1, 1], [], []>} : vector<8x128xbf16>, vector<128x128xbf16>, vector<8x128xf32> -> vector<8x128xf32>
    %c2_27 = arith.constant 2 : index
    %c0_28 = arith.constant 0 : index
    %c0_29 = arith.constant 0 : index
    %93 = vector.load %arg5[%c2_27, %c0_28, %c0_29] : memref<6x1x128xf32, #tpu.memory_space<vmem>>, vector<1x1x128xf32>
    %94 = vector.shape_cast %93 : vector<1x1x128xf32> to vector<1x128xf32>
    %95 = vector.broadcast %94 : vector<1x128xf32> to vector<8x128xf32>
    %96 = arith.addf %92, %95 : vector<8x128xf32>
    %cst_30 = arith.constant 0.000000e+00 : f32
    %97 = vector.broadcast %cst_30 : f32 to vector<8x128xf32>
    %98 = arith.maximumf %96, %97 : vector<8x128xf32>
    %99 = arith.truncf %98 : vector<8x128xf32> to vector<8x128xbf16>
    %c3 = arith.constant 3 : index
    %c0_31 = arith.constant 0 : index
    %c0_32 = arith.constant 0 : index
    %100 = vector.load %arg4[%c3, %c0_31, %c0_32] : memref<6x128x128xbf16, #tpu.memory_space<vmem>>, vector<1x128x128xbf16>
    %101 = vector.shape_cast %100 : vector<1x128x128xbf16> to vector<128x128xbf16>
    %cst_33 = arith.constant dense<0.000000e+00> : vector<8x128xf32>
    %102 = tpu.matmul %99, %101, %cst_33 {dimension_numbers = #tpu.dot_dimension_numbers<[1], [0], [0], [1], [0, 0, 1, 1], [], []>} : vector<8x128xbf16>, vector<128x128xbf16>, vector<8x128xf32> -> vector<8x128xf32>
    %c3_34 = arith.constant 3 : index
    %c0_35 = arith.constant 0 : index
    %c0_36 = arith.constant 0 : index
    %103 = vector.load %arg5[%c3_34, %c0_35, %c0_36] : memref<6x1x128xf32, #tpu.memory_space<vmem>>, vector<1x1x128xf32>
    %104 = vector.shape_cast %103 : vector<1x1x128xf32> to vector<1x128xf32>
    %105 = vector.broadcast %104 : vector<1x128xf32> to vector<8x128xf32>
    %106 = arith.addf %102, %105 : vector<8x128xf32>
    %cst_37 = arith.constant 0.000000e+00 : f32
    %107 = vector.broadcast %cst_37 : f32 to vector<8x128xf32>
    %108 = arith.maximumf %106, %107 : vector<8x128xf32>
    %109 = arith.truncf %108 : vector<8x128xf32> to vector<8x128xbf16>
    %c4 = arith.constant 4 : index
    %c0_38 = arith.constant 0 : index
    %c0_39 = arith.constant 0 : index
    %110 = vector.load %arg4[%c4, %c0_38, %c0_39] : memref<6x128x128xbf16, #tpu.memory_space<vmem>>, vector<1x128x128xbf16>
    %111 = vector.shape_cast %110 : vector<1x128x128xbf16> to vector<128x128xbf16>
    %cst_40 = arith.constant dense<0.000000e+00> : vector<8x128xf32>
    %112 = tpu.matmul %109, %111, %cst_40 {dimension_numbers = #tpu.dot_dimension_numbers<[1], [0], [0], [1], [0, 0, 1, 1], [], []>} : vector<8x128xbf16>, vector<128x128xbf16>, vector<8x128xf32> -> vector<8x128xf32>
    %c4_41 = arith.constant 4 : index
    %c0_42 = arith.constant 0 : index
    %c0_43 = arith.constant 0 : index
    %113 = vector.load %arg5[%c4_41, %c0_42, %c0_43] : memref<6x1x128xf32, #tpu.memory_space<vmem>>, vector<1x1x128xf32>
    %114 = vector.shape_cast %113 : vector<1x1x128xf32> to vector<1x128xf32>
    %115 = vector.broadcast %114 : vector<1x128xf32> to vector<8x128xf32>
    %116 = arith.addf %112, %115 : vector<8x128xf32>
    %cst_44 = arith.constant 0.000000e+00 : f32
    %117 = vector.broadcast %cst_44 : f32 to vector<8x128xf32>
    %118 = arith.maximumf %116, %117 : vector<8x128xf32>
    %119 = arith.truncf %118 : vector<8x128xf32> to vector<8x128xbf16>
    %c5 = arith.constant 5 : index
    %c0_45 = arith.constant 0 : index
    %c0_46 = arith.constant 0 : index
    %120 = vector.load %arg4[%c5, %c0_45, %c0_46] : memref<6x128x128xbf16, #tpu.memory_space<vmem>>, vector<1x128x128xbf16>
    %121 = vector.shape_cast %120 : vector<1x128x128xbf16> to vector<128x128xbf16>
    %cst_47 = arith.constant dense<0.000000e+00> : vector<8x128xf32>
    %122 = tpu.matmul %119, %121, %cst_47 {dimension_numbers = #tpu.dot_dimension_numbers<[1], [0], [0], [1], [0, 0, 1, 1], [], []>} : vector<8x128xbf16>, vector<128x128xbf16>, vector<8x128xf32> -> vector<8x128xf32>
    %c5_48 = arith.constant 5 : index
    %c0_49 = arith.constant 0 : index
    %c0_50 = arith.constant 0 : index
    %123 = vector.load %arg5[%c5_48, %c0_49, %c0_50] : memref<6x1x128xf32, #tpu.memory_space<vmem>>, vector<1x1x128xf32>
    %124 = vector.shape_cast %123 : vector<1x1x128xf32> to vector<1x128xf32>
    %125 = vector.broadcast %124 : vector<1x128xf32> to vector<8x128xf32>
    %126 = arith.addf %122, %125 : vector<8x128xf32>
    %cst_51 = arith.constant 0.000000e+00 : f32
    %127 = vector.broadcast %cst_51 : f32 to vector<8x128xf32>
    %128 = arith.maximumf %126, %127 : vector<8x128xf32>
    %129 = arith.truncf %128 : vector<8x128xf32> to vector<8x128xbf16>
    %c0_52 = arith.constant 0 : index
    %c0_53 = arith.constant 0 : index
    %130 = vector.load %arg6[%c0_52, %c0_53] : memref<128x8xbf16, #tpu.memory_space<vmem>>, vector<128x8xbf16>
    %cst_54 = arith.constant dense<0.000000e+00> : vector<8x8xf32>
    %131 = tpu.matmul %129, %130, %cst_54 {dimension_numbers = #tpu.dot_dimension_numbers<[1], [0], [0], [1], [0, 0, 1, 1], [], []>} : vector<8x128xbf16>, vector<128x8xbf16>, vector<8x8xf32> -> vector<8x8xf32>
    %c0_55 = arith.constant 0 : index
    %c0_56 = arith.constant 0 : index
    %132 = vector.load %arg7[%c0_55, %c0_56] : memref<1x8xf32, #tpu.memory_space<vmem>>, vector<1x8xf32>
    %133 = vector.broadcast %132 : vector<1x8xf32> to vector<8x8xf32>
    %134 = arith.addf %131, %133 : vector<8x8xf32>
    %c0_57 = arith.constant 0 : index
    %c0_58 = arith.constant 0 : index
    %135 = vector.load %arg8[%c0_57, %c0_58] : memref<8x8xf32, #tpu.memory_space<vmem>>, vector<8x8xf32>
    tpu.vector_store %arg8[%c0_57, %c0_58], %134 {strides = array<i32>} : memref<8x8xf32, #tpu.memory_space<vmem>>, vector<8x8xf32>,
    return
  }
  func.func @transform_0(%arg0: i32) -> (i32, i32) {
    %c0_i32 = arith.constant 0 : i32
    %c0_i32_0 = arith.constant 0 : i32
    return %arg0, %c0_i32 : i32, i32
  }
  func.func @transform_1(%arg0: i32) -> (i32, i32) {
    %c0_i32 = arith.constant 0 : i32
    %c0_i32_0 = arith.constant 0 : i32
    %c0_i32_1 = arith.constant 0 : i32
    return %c0_i32, %c0_i32_0 : i32, i32
  }
  func.func @transform_2(%arg0: i32) -> (i32, i32) {
    %c0_i32 = arith.constant 0 : i32
    %c0_i32_0 = arith.constant 0 : i32
    %c0_i32_1 = arith.constant 0 : i32
    return %c0_i32, %c0_i32_0 : i32, i32
  }
  func.func @transform_3(%arg0: i32) -> (i32, i32, i32) {
    %c0_i32 = arith.constant 0 : i32
    %c0_i32_0 = arith.constant 0 : i32
    %c0_i32_1 = arith.constant 0 : i32
    %c0_i32_2 = arith.constant 0 : i32
    return %c0_i32, %c0_i32_0, %c0_i32_1 : i32, i32, i32
  }
  func.func @transform_4(%arg0: i32) -> (i32, i32, i32) {
    %c0_i32 = arith.constant 0 : i32
    %c0_i32_0 = arith.constant 0 : i32
    %c0_i32_1 = arith.constant 0 : i32
    %c0_i32_2 = arith.constant 0 : i32
    return %c0_i32, %c0_i32_0, %c0_i32_1 : i32, i32, i32
  }
  func.func @transform_5(%arg0: i32) -> (i32, i32) {
    %c0_i32 = arith.constant 0 : i32
    %c0_i32_0 = arith.constant 0 : i32
    %c0_i32_1 = arith.constant 0 : i32
    return %c0_i32, %c0_i32_0 : i32, i32
  }
  func.func @transform_6(%arg0: i32) -> (i32, i32) {
    %c0_i32 = arith.constant 0 : i32
    %c0_i32_0 = arith.constant 0 : i32
    %c0_i32_1 = arith.constant 0 : i32
    return %c0_i32, %c0_i32_0 : i32, i32
  }
  func.func @transform_7(%arg0: i32) -> (i32, i32) {
    %c0_i32 = arith.constant 0 : i32
    %c0_i32_0 = arith.constant 0 : i32
    return %arg0, %c0_i32 : i32, i32
  }
}

</mosaic_0001>

<llo_original>
// kernel: fnn_forward.1
$region0: #{fnn_forward.1}
  #allocation0 [shape = 'u32[]', space=smem, size = 0x4, offset = 0x4, fixed_abs, tag = 'smem constant byte address 0x4 - core index']
  #allocation1 [shape = 'u32[144,128]{1,0:T(1,128)}', space=vmem, size = 0x12000, scoped, tag = 'internal scratch']
  %s0 = inlined_call_operand.vmem [shape: f32[8,16], index: 0, kind: input, shape index: {}]
  %s1 = inlined_call_operand.vmem [shape: f32[8,128], index: 1, kind: input, shape index: {}]
  %s2 = inlined_call_operand.hbm [shape: f32[128,128], index: 2, kind: input, shape index: {}]
  %s3 = inlined_call_operand.hbm [shape: bf16[6,128,128], index: 3, kind: input, shape index: {}]
  %s4 = inlined_call_operand.vmem [shape: f32[6,1,128], index: 4, kind: input, shape index: {}]
  %s5 = inlined_call_operand.vmem [shape: bf16[128,8], index: 5, kind: input, shape index: {}]
  %s6 = inlined_call_operand.vmem [shape: f32[1,8], index: 6, kind: input, shape index: {}]
  %s7 = inlined_call_operand.vmem [shape: f32[8,8], index: 7, kind: output, shape index: {}]
  %s8 = sld [smem:[#allocation0]]
  $region46: #{fnn_forward.1} parent=0
    _
  %s10 = ssub.s32 1, %s8
  %s11 = scalar_select 0, %s10, %s8
  $region1: #{fnn_forward.1} parent=0
    #allocation2 [shape = 'u8[65536]{0}', space=vmem, size = 0x10000, scoped, tag = 'input window, operand 2, single buffered']
    #allocation3 [shape = 's32[1]{0}', space=sflag, size = 0x4, scoped, tag = 'scoped memory for fnn_forward.1']
    #allocation4 [shape = 'u8[196608]{0}', space=vmem, size = 0x30000, scoped, tag = 'input window, operand 3, single buffered']
    #allocation5 [shape = 's32[1]{0}', space=sflag, size = 0x4, scoped, tag = 'scoped memory for fnn_forward.1']
    %12 = vsyncpa [#allocation3], 0
    %13 = vsyncpa [#allocation5], 0
    // Predicated region
    $region2: #{fnn_forward.1} parent=1 // pred_check
      _
    $region3: #{fnn_forward.1} parent=1 // pred_check_branch
      %15 = sbr.rel (0) target = $region5
    $region4: #{fnn_forward.1} parent=1 // pred_region
      _
    $region5: #{fnn_forward.1} parent=1 // pred_fallthru
      _
    // Predicated region
    $region6: #{fnn_forward.1} parent=1 // pred_check
      _
    $region7: #{fnn_forward.1} parent=1 // pred_check_branch
      %17 = sbr.rel (0) target = $region9
    $region8: #{fnn_forward.1} parent=1 // pred_region
      _
    $region9: #{fnn_forward.1} parent=1 // pred_fallthru
      _
    // Predicated region
    $region10: #{fnn_forward.1} parent=1 // pred_check
      _
    $region11: #{fnn_forward.1} parent=1 // pred_check_branch
      %19 = sbr.rel (0) target = $region13
    $region12: #{fnn_forward.1} parent=1 // pred_region
      %s21 = ssub.s32 2048, 2048
      %22 = vsyncadd [#allocation3], %s21
      %s23 = sshll.u32 [#allocation2], 4
      %s24 = int_to_ptr.vmem [resolvable:$true] %s23
      %29 = dma.hbm_to_vmem [thread:$0]  %s2, 2048, %s24, [#allocation3], 128, 128, 8
    $region13: #{fnn_forward.1} parent=1 // pred_fallthru
      _
    // Predicated region
    $region14: #{fnn_forward.1} parent=1 // pred_check
      _
    $region15: #{fnn_forward.1} parent=1 // pred_check_branch
      %31 = sbr.rel (0) target = $region17
    $region16: #{fnn_forward.1} parent=1 // pred_region
      %s33 = ssub.s32 6144, 6144
      %34 = vsyncadd [#allocation5], %s33
      %s35 = sshll.u32 [#allocation4], 4
      %s36 = int_to_ptr.vmem [resolvable:$true] %s35
      %41 = dma.hbm_to_vmem [thread:$0]  %s3, 6144, %s36, [#allocation5], 64, 64, 4
    $region17: #{fnn_forward.1} parent=1 // pred_fallthru
      _
    // Predicated region
    $region18: #{fnn_forward.1} parent=1 // pred_check
      _
    $region19: #{fnn_forward.1} parent=1 // pred_check_branch
      %43 = sbr.rel (0) target = $region21
    $region20: #{fnn_forward.1} parent=1 // pred_region
      _
    $region21: #{fnn_forward.1} parent=1 // pred_fallthru
      _
    // Predicated region
    $region22: #{fnn_forward.1} parent=1 // pred_check
      _
    $region23: #{fnn_forward.1} parent=1 // pred_check_branch
      %45 = sbr.rel (0) target = $region25
    $region24: #{fnn_forward.1} parent=1 // pred_region
      _
    $region25: #{fnn_forward.1} parent=1 // pred_fallthru
      _
    // Predicated region
    $region26: #{fnn_forward.1} parent=1 // pred_check
      _
    $region27: #{fnn_forward.1} parent=1 // pred_check_branch
      %47 = sbr.rel (0) target = $region29
    $region28: #{fnn_forward.1} parent=1 // pred_region
      _
    $region29: #{fnn_forward.1} parent=1 // pred_fallthru
      _
    // Predicated region
    $region30: #{fnn_forward.1} parent=1 // pred_check
      _
    $region31: #{fnn_forward.1} parent=1 // pred_check_branch
      %49 = sbr.rel (0) target = $region33
    $region32: #{fnn_forward.1} parent=1 // pred_region
      %50 = dma.done [#allocation3], 2048
    $region33: #{fnn_forward.1} parent=1 // pred_fallthru
      _
    // Predicated region
    $region34: #{fnn_forward.1} parent=1 // pred_check
      _
    $region35: #{fnn_forward.1} parent=1 // pred_check_branch
      %52 = sbr.rel (0) target = $region37
    $region36: #{fnn_forward.1} parent=1 // pred_region
      %53 = dma.done [#allocation5], 6144
    $region37: #{fnn_forward.1} parent=1 // pred_fallthru
      _
    %v55 = vld [vmem:[%s0] sm:$0xff]
    %v56 = vld [vmem:[%s1] sm:$0x1]
    %58 = vset.pattern.permute.xlu0 0
    %59 = vperm.xlu0 %58, %v55
    %v60 = vpop.permute.xlu0 %59
    %v62 = vlaneseq
    %v63 = vshrl.u32 %v62, 7
    %v64 = vsub.s32 0, %v63
    %v65 = vrot.slane %v56, %v64
    %v66 = vmul.f32 %v60, %v65
    %v67 = vld [vmem:[%s1 + $0x1] sm:$0x1]
    %68 = vset.pattern.permute.xlu0 1
    %69 = vperm.xlu0 %68, %v55
    %v70 = vpop.permute.xlu0 %69
    %v72 = vlaneseq
    %v73 = vshrl.u32 %v72, 7
    %v74 = vsub.s32 0, %v73
    %v75 = vrot.slane %v67, %v74
    %v76 = vmul.f32 %v70, %v75
    %v77 = vadd.f32 %v66, %v76
    %v78 = vld [vmem:[%s1 + $0x2] sm:$0x1]
    %v79 = vlaneseq
    %v80 = vshrl.u32 %v79, 7
    %v81 = vsub.s32 0, %v80
    %v82 = vrot.slane %v78, %v81
    %v83 = vadd.f32 %v77, %v82
    %v84 = vlaneseq
    %v85 = vand.u32 %v84, 127
    %v86 = vcvt.f32.s32.to.zero.pseudo %v55
    %87 = vset.pattern.permute.xlu0 2
    %88 = vperm.xlu0 %87, %v86
    %v89 = vpop.permute.xlu0 %88
    %vm90 = vcmp.eq.s32.totalorder %v85, %v89
    %v91 = vadd.s32 %v86, 22
    %92 = vset.pattern.permute.xlu0 3
    %93 = vperm.xlu0 %92, %v91
    %v94 = vpop.permute.xlu0 %93
    %vm95 = vcmp.eq.s32.totalorder %v85, %v94
    %vm96 = vmor %vm90, %vm95
    %v97 = vadd.s32 %v86, 44
    %98 = vset.pattern.permute.xlu0 4
    %99 = vperm.xlu0 %98, %v97
    %v100 = vpop.permute.xlu0 %99
    %vm101 = vcmp.eq.s32.totalorder %v85, %v100
    %vm102 = vmor %vm96, %vm101
    %v103 = vadd.s32 %v86, 48
    %104 = vset.pattern.permute.xlu0 5
    %105 = vperm.xlu0 %104, %v103
    %v106 = vpop.permute.xlu0 %105
    %vm107 = vcmp.eq.s32.totalorder %v85, %v106
    %vm108 = vmor %vm102, %vm107
    %v109 = vadd.s32 %v86, 50
    %110 = vset.pattern.permute.xlu0 6
    %111 = vperm.xlu0 %110, %v109
    %v112 = vpop.permute.xlu0 %111
    %vm113 = vcmp.eq.s32.totalorder %v85, %v112
    %vm114 = vmor %vm108, %vm113
    %v115 = vadd.s32 %v86, 52
    %116 = vset.pattern.permute.xlu0 7
    %117 = vperm.xlu0 %116, %v115
    %v118 = vpop.permute.xlu0 %117
    %vm119 = vcmp.eq.s32.totalorder %v85, %v118
    %vm120 = vmor %vm114, %vm119
    %v121 = vadd.s32 %v86, 54
    %122 = vset.pattern.permute.xlu0 8
    %123 = vperm.xlu0 %122, %v121
    %v124 = vpop.permute.xlu0 %123
    %vm125 = vcmp.eq.s32.totalorder %v85, %v124
    %vm126 = vmor %vm120, %vm125
    %v127 = vsel %vm126, 1, 0
    %v128 = vcvt.s32.f32 %v127
    %v129 = vld [vmem:[#allocation2] sm:$0xff]
    %v130 = vld [vmem:[#allocation2 + $0x8] sm:$0xff]
    %v131 = vld [vmem:[#allocation2 + $0x10] sm:$0xff]
    %v132 = vld [vmem:[#allocation2 + $0x18] sm:$0xff]
    %v133 = vld [vmem:[#allocation2 + $0x20] sm:$0xff]
    %v134 = vld [vmem:[#allocation2 + $0x28] sm:$0xff]
    %v135 = vld [vmem:[#allocation2 + $0x30] sm:$0xff]
    %v136 = vld [vmem:[#allocation2 + $0x38] sm:$0xff]
    %v137 = vld [vmem:[#allocation2 + $0x40] sm:$0xff]
    %v138 = vld [vmem:[#allocation2 + $0x48] sm:$0xff]
    %v139 = vld [vmem:[#allocation2 + $0x50] sm:$0xff]
    %v140 = vld [vmem:[#allocation2 + $0x58] sm:$0xff]
    %v141 = vld [vmem:[#allocation2 + $0x60] sm:$0xff]
    %v142 = vld [vmem:[#allocation2 + $0x68] sm:$0xff]
    %v143 = vld [vmem:[#allocation2 + $0x70] sm:$0xff]
    %v144 = vld [vmem:[#allocation2 + $0x78] sm:$0xff]
    %145 = vmatprep.subr.mxu0 0.0
    %146 = vmatpush1.msra.mxu0 %v129
    %147 = vmatprep.subr.mxu0 0.0
    %148 = vmatpush1.msra.mxu0 %v130
    %149 = vmatprep.subr.mxu0 0.0
    %150 = vmatpush1.msra.mxu0 %v131
    %151 = vmatprep.subr.mxu0 0.0
    %152 = vmatpush1.msra.mxu0 %v132
    %153 = vmatprep.subr.mxu0 0.0
    %154 = vmatpush1.msra.mxu0 %v133
    %155 = vmatprep.subr.mxu0 0.0
    %156 = vmatpush1.msra.mxu0 %v134
    %157 = vmatprep.subr.mxu0 0.0
    %158 = vmatpush1.msra.mxu0 %v135
    %159 = vmatprep.subr.mxu0 0.0
    %160 = vmatpush1.msra.mxu0 %v136
    %161 = vmatprep.subr.mxu0 0.0
    %162 = vmatpush1.msra.mxu0 %v137
    %163 = vmatprep.subr.mxu0 0.0
    %164 = vmatpush1.msra.mxu0 %v138
    %165 = vmatprep.subr.mxu0 0.0
    %166 = vmatpush1.msra.mxu0 %v139
    %167 = vmatprep.subr.mxu0 0.0
    %168 = vmatpush1.msra.mxu0 %v140
    %169 = vmatprep.subr.mxu0 0.0
    %170 = vmatpush1.msra.mxu0 %v141
    %171 = vmatprep.subr.mxu0 0.0
    %172 = vmatpush1.msra.mxu0 %v142
    %173 = vmatprep.subr.mxu0 0.0
    %174 = vmatpush1.msra.mxu0 %v143
    %175 = vmatprep.subr.mxu0 0.0
    %176 = vmatpush1.msra.mxu0 %v144
    %177 = vmatprep.subr.mxu0 0.0
    %178 = vmatpush1.msra.mxu0 0.0
    %179 = vmatprep.subr.mxu0 0.0
    %180 = vmatpush1.msra.mxu0 0.0
    %181 = vmatprep.subr.mxu0 0.0
    %182 = vmatpush1.msra.mxu0 0.0
    %183 = vmatprep.subr.mxu0 0.0
    %184 = vmatpush1.msra.mxu0 0.0
    %185 = vmatprep.subr.mxu0 0.0
    %186 = vmatpush1.msra.mxu0 0.0
    %187 = vmatprep.subr.mxu0 0.0
    %188 = vmatpush1.msra.mxu0 0.0
    %189 = vmatprep.subr.mxu0 0.0
    %190 = vmatpush1.msra.mxu0 0.0
    %191 = vmatprep.subr.mxu0 0.0
    %192 = vmatpush1.msra.mxu0 0.0
    %193 = vmatprep.subr.mxu0 0.0
    %194 = vmatpush1.msra.mxu0 0.0
    %195 = vmatprep.subr.mxu0 0.0
    %196 = vmatpush1.msra.mxu0 0.0
    %197 = vmatprep.subr.mxu0 0.0
    %198 = vmatpush1.msra.mxu0 0.0
    %199 = vmatprep.subr.mxu0 0.0
    %200 = vmatpush1.msra.mxu0 0.0
    %201 = vmatprep.subr.mxu0 0.0
    %202 = vmatpush1.msra.mxu0 0.0
    %203 = vmatprep.subr.mxu0 0.0
    %204 = vmatpush1.msra.mxu0 0.0
    %205 = vmatprep.subr.mxu0 0.0
    %206 = vmatpush1.msra.mxu0 0.0
    %207 = vmatprep.subr.mxu0 0.0
    %208 = vmatpush1.msra.mxu0 0.0
    %209 = vmatprep.mubr.f32.mxu0 0.0
    %210 = vmatmul.mubr.f32.gmra.mrb[0].mxu0 %v128
    %v211 = vpop.f32.mrb[0].mxu0
    %v212 = vadd.f32 0.0, %v211
    %v213 = vpop.f32.mrb[0].mxu0
    %214 = vdwg.mxu0
    %v215 = vadd.f32 %v83, %v212
    %v216 = vpack.c.bf16 %v215, %v215
    %v217 = vld [vmem:[#allocation4] sm:$0xf]
    %v218 = vld [vmem:[#allocation4 + $0x4] sm:$0xf]
    %v219 = vld [vmem:[#allocation4 + $0x8] sm:$0xf]
    %v220 = vld [vmem:[#allocation4 + $0xc] sm:$0xf]
    %v221 = vld [vmem:[#allocation4 + $0x10] sm:$0xf]
    %v222 = vld [vmem:[#allocation4 + $0x14] sm:$0xf]
    %v223 = vld [vmem:[#allocation4 + $0x18] sm:$0xf]
    %v224 = vld [vmem:[#allocation4 + $0x1c] sm:$0xf]
    %v225 = vld [vmem:[#allocation4 + $0x20] sm:$0xf]
    %v226 = vld [vmem:[#allocation4 + $0x24] sm:$0xf]
    %v227 = vld [vmem:[#allocation4 + $0x28] sm:$0xf]
    %v228 = vld [vmem:[#allocation4 + $0x2c] sm:$0xf]
    %v229 = vld [vmem:[#allocation4 + $0x30] sm:$0xf]
    %v230 = vld [vmem:[#allocation4 + $0x34] sm:$0xf]
    %v231 = vld [vmem:[#allocation4 + $0x38] sm:$0xf]
    %v232 = vld [vmem:[#allocation4 + $0x3c] sm:$0xf]
    %v233 = vld [vmem:[%s4] sm:$0x1]
    %v235 = vlaneseq
    %v236 = vshrl.u32 %v235, 7
    %v237 = vsub.s32 0, %v236
    %v238 = vrot.slane %v233, %v237
    %v256 = vunpack.c.l.b16 %v217
    %v257 = vunpack.c.l.b16 %v218
    %v258 = vunpack.c.l.b16 %v219
    %v259 = vunpack.c.l.b16 %v220
    %v260 = vunpack.c.l.b16 %v221
    %v261 = vunpack.c.l.b16 %v222
    %v262 = vunpack.c.l.b16 %v223
    %v263 = vunpack.c.l.b16 %v224
    %v264 = vunpack.c.l.b16 %v225
    %v265 = vunpack.c.l.b16 %v226
    %v266 = vunpack.c.l.b16 %v227
    %v267 = vunpack.c.l.b16 %v228
    %v268 = vunpack.c.l.b16 %v229
    %v269 = vunpack.c.l.b16 %v230
    %v270 = vunpack.c.l.b16 %v231
    %v271 = vunpack.c.l.b16 %v232
    %v272 = vpack.c.b16 %v257, %v256
    %v273 = vpack.c.b16 %v259, %v258
    %v274 = vpack.c.b16 %v261, %v260
    %v275 = vpack.c.b16 %v263, %v262
    %v276 = vpack.c.b16 %v265, %v264
    %v277 = vpack.c.b16 %v267, %v266
    %v278 = vpack.c.b16 %v269, %v268
    %v279 = vpack.c.b16 %v271, %v270
    %288 = vmatprep.subr.bf16.mxu0 0
    %289 = vmatpush1.bf16.msra.mxu0 %v272
    %290 = vmatprep.subr.bf16.mxu0 0
    %291 = vmatpush1.bf16.msra.mxu0 %v273
    %292 = vmatprep.subr.bf16.mxu0 0
    %293 = vmatpush1.bf16.msra.mxu0 %v274
    %294 = vmatprep.subr.bf16.mxu0 0
    %295 = vmatpush1.bf16.msra.mxu0 %v275
    %296 = vmatprep.subr.bf16.mxu0 0
    %297 = vmatpush1.bf16.msra.mxu0 %v276
    %298 = vmatprep.subr.bf16.mxu0 0
    %299 = vmatpush1.bf16.msra.mxu0 %v277
    %300 = vmatprep.subr.bf16.mxu0 0
    %301 = vmatpush1.bf16.msra.mxu0 %v278
    %302 = vmatprep.subr.bf16.mxu0 0
    %303 = vmatpush1.bf16.msra.mxu0 %v279
    %304 = vmatprep.subr.bf16.mxu0 0
    %305 = vmatpush1.bf16.msra.mxu0 0
    %306 = vmatprep.subr.bf16.mxu0 0
    %307 = vmatpush1.bf16.msra.mxu0 0
    %308 = vmatprep.subr.bf16.mxu0 0
    %309 = vmatpush1.bf16.msra.mxu0 0
    %310 = vmatprep.subr.bf16.mxu0 0
    %311 = vmatpush1.bf16.msra.mxu0 0
    %312 = vmatprep.subr.bf16.mxu0 0
    %313 = vmatpush1.bf16.msra.mxu0 0
    %314 = vmatprep.subr.bf16.mxu0 0
    %315 = vmatpush1.bf16.msra.mxu0 0
    %316 = vmatprep.subr.bf16.mxu0 0
    %317 = vmatpush1.bf16.msra.mxu0 0
    %318 = vmatprep.subr.bf16.mxu0 0
    %319 = vmatpush1.bf16.msra.mxu0 0
    %320 = vmatprep.mubr.bf16.mxu0 0
    %321 = vmatmul.mubr.bf16.gmra.mrb[0].mxu0 %v216
    %v322 = vpop.f32.mrb[0].mxu0
    %v323 = vadd.f32 %v238, %v322
    %v324 = vpop.f32.mrb[0].mxu0
    %v325 = vpop.f32.mrb[0].mxu0
    %v326 = vpop.f32.mrb[0].mxu0
    %327 = vdwg.mxu0
    %v328 = vmax.f32 %v323, 0.0
    %v329 = vpack.c.bf16 %v328, %v328
    %s330 = scalar_lea.vmem [#allocation4], 64
    %v331 = vld [vmem:[%s330] sm:$0xf]
    %v332 = vld [vmem:[%s330 + $0x4] sm:$0xf]
    %v333 = vld [vmem:[%s330 + $0x8] sm:$0xf]
    %v334 = vld [vmem:[%s330 + $0xc] sm:$0xf]
    %v335 = vld [vmem:[%s330 + $0x10] sm:$0xf]
    %v336 = vld [vmem:[%s330 + $0x14] sm:$0xf]
    %v337 = vld [vmem:[%s330 + $0x18] sm:$0xf]
    %v338 = vld [vmem:[%s330 + $0x1c] sm:$0xf]
    %v339 = vld [vmem:[%s330 + $0x20] sm:$0xf]
    %v340 = vld [vmem:[%s330 + $0x24] sm:$0xf]
    %v341 = vld [vmem:[%s330 + $0x28] sm:$0xf]
    %v342 = vld [vmem:[%s330 + $0x2c] sm:$0xf]
    %v343 = vld [vmem:[%s330 + $0x30] sm:$0xf]
    %v344 = vld [vmem:[%s330 + $0x34] sm:$0xf]
    %v345 = vld [vmem:[%s330 + $0x38] sm:$0xf]
    %v346 = vld [vmem:[%s330 + $0x3c] sm:$0xf]
    %s347 = scalar_lea.vmem %s4, 1
    %v348 = vld [vmem:[%s347] sm:$0x1]
    %v350 = vlaneseq
    %v351 = vshrl.u32 %v350, 7
    %v352 = vsub.s32 0, %v351
    %v353 = vrot.slane %v348, %v352
    %v371 = vunpack.c.l.b16 %v331
    %v372 = vunpack.c.l.b16 %v332
    %v373 = vunpack.c.l.b16 %v333
    %v374 = vunpack.c.l.b16 %v334
    %v375 = vunpack.c.l.b16 %v335
    %v376 = vunpack.c.l.b16 %v336
    %v377 = vunpack.c.l.b16 %v337
    %v378 = vunpack.c.l.b16 %v338
    %v379 = vunpack.c.l.b16 %v339
    %v380 = vunpack.c.l.b16 %v340
    %v381 = vunpack.c.l.b16 %v341
    %v382 = vunpack.c.l.b16 %v342
    %v383 = vunpack.c.l.b16 %v343
    %v384 = vunpack.c.l.b16 %v344
    %v385 = vunpack.c.l.b16 %v345
    %v386 = vunpack.c.l.b16 %v346
    %v387 = vpack.c.b16 %v372, %v371
    %v388 = vpack.c.b16 %v374, %v373
    %v389 = vpack.c.b16 %v376, %v375
    %v390 = vpack.c.b16 %v378, %v377
    %v391 = vpack.c.b16 %v380, %v379
    %v392 = vpack.c.b16 %v382, %v381
    %v393 = vpack.c.b16 %v384, %v383
    %v394 = vpack.c.b16 %v386, %v385
    %403 = vmatprep.subr.bf16.mxu0 0
    %404 = vmatpush1.bf16.msra.mxu0 %v387
    %405 = vmatprep.subr.bf16.mxu0 0
    %406 = vmatpush1.bf16.msra.mxu0 %v388
    %407 = vmatprep.subr.bf16.mxu0 0
    %408 = vmatpush1.bf16.msra.mxu0 %v389
    %409 = vmatprep.subr.bf16.mxu0 0
    %410 = vmatpush1.bf16.msra.mxu0 %v390
    %411 = vmatprep.subr.bf16.mxu0 0
    %412 = vmatpush1.bf16.msra.mxu0 %v391
    %413 = vmatprep.subr.bf16.mxu0 0
    %414 = vmatpush1.bf16.msra.mxu0 %v392
    %415 = vmatprep.subr.bf16.mxu0 0
    %416 = vmatpush1.bf16.msra.mxu0 %v393
    %417 = vmatprep.subr.bf16.mxu0 0
    %418 = vmatpush1.bf16.msra.mxu0 %v394
    %419 = vmatprep.subr.bf16.mxu0 0
    %420 = vmatpush1.bf16.msra.mxu0 0
    %421 = vmatprep.subr.bf16.mxu0 0
    %422 = vmatpush1.bf16.msra.mxu0 0
    %423 = vmatprep.subr.bf16.mxu0 0
    %424 = vmatpush1.bf16.msra.mxu0 0
    %425 = vmatprep.subr.bf16.mxu0 0
    %426 = vmatpush1.bf16.msra.mxu0 0
    %427 = vmatprep.subr.bf16.mxu0 0
    %428 = vmatpush1.bf16.msra.mxu0 0
    %429 = vmatprep.subr.bf16.mxu0 0
    %430 = vmatpush1.bf16.msra.mxu0 0
    %431 = vmatprep.subr.bf16.mxu0 0
    %432 = vmatpush1.bf16.msra.mxu0 0
    %433 = vmatprep.subr.bf16.mxu0 0
    %434 = vmatpush1.bf16.msra.mxu0 0
    %435 = vmatprep.mubr.bf16.mxu0 0
    %436 = vmatmul.mubr.bf16.gmra.mrb[0].mxu0 %v329
    %v437 = vpop.f32.mrb[0].mxu0
    %v438 = vadd.f32 %v353, %v437
    %v439 = vpop.f32.mrb[0].mxu0
    %v440 = vpop.f32.mrb[0].mxu0
    %v441 = vpop.f32.mrb[0].mxu0
    %442 = vdwg.mxu0
    %v443 = vmax.f32 %v438, 0.0
    %v444 = vpack.c.bf16 %v443, %v443
    %s445 = scalar_lea.vmem [#allocation4], 128
    %v446 = vld [vmem:[%s445] sm:$0xf]
    %v447 = vld [vmem:[%s445 + $0x4] sm:$0xf]
    %v448 = vld [vmem:[%s445 + $0x8] sm:$0xf]
    %v449 = vld [vmem:[%s445 + $0xc] sm:$0xf]
    %v450 = vld [vmem:[%s445 + $0x10] sm:$0xf]
    %v451 = vld [vmem:[%s445 + $0x14] sm:$0xf]
    %v452 = vld [vmem:[%s445 + $0x18] sm:$0xf]
    %v453 = vld [vmem:[%s445 + $0x1c] sm:$0xf]
    %v454 = vld [vmem:[%s445 + $0x20] sm:$0xf]
    %v455 = vld [vmem:[%s445 + $0x24] sm:$0xf]
    %v456 = vld [vmem:[%s445 + $0x28] sm:$0xf]
    %v457 = vld [vmem:[%s445 + $0x2c] sm:$0xf]
    %v458 = vld [vmem:[%s445 + $0x30] sm:$0xf]
    %v459 = vld [vmem:[%s445 + $0x34] sm:$0xf]
    %v460 = vld [vmem:[%s445 + $0x38] sm:$0xf]
    %v461 = vld [vmem:[%s445 + $0x3c] sm:$0xf]
    %s462 = scalar_lea.vmem %s4, 2
    %v463 = vld [vmem:[%s462] sm:$0x1]
    %v465 = vlaneseq
    %v466 = vshrl.u32 %v465, 7
    %v467 = vsub.s32 0, %v466
    %v468 = vrot.slane %v463, %v467
    %v486 = vunpack.c.l.b16 %v446
    %v487 = vunpack.c.l.b16 %v447
    %v488 = vunpack.c.l.b16 %v448
    %v489 = vunpack.c.l.b16 %v449
    %v490 = vunpack.c.l.b16 %v450
    %v491 = vunpack.c.l.b16 %v451
    %v492 = vunpack.c.l.b16 %v452
    %v493 = vunpack.c.l.b16 %v453
    %v494 = vunpack.c.l.b16 %v454
    %v495 = vunpack.c.l.b16 %v455
    %v496 = vunpack.c.l.b16 %v456
    %v497 = vunpack.c.l.b16 %v457
    %v498 = vunpack.c.l.b16 %v458
    %v499 = vunpack.c.l.b16 %v459
    %v500 = vunpack.c.l.b16 %v460
    %v501 = vunpack.c.l.b16 %v461
    %v502 = vpack.c.b16 %v487, %v486
    %v503 = vpack.c.b16 %v489, %v488
    %v504 = vpack.c.b16 %v491, %v490
    %v505 = vpack.c.b16 %v493, %v492
    %v506 = vpack.c.b16 %v495, %v494
    %v507 = vpack.c.b16 %v497, %v496
    %v508 = vpack.c.b16 %v499, %v498
    %v509 = vpack.c.b16 %v501, %v500
    %518 = vmatprep.subr.bf16.mxu0 0
    %519 = vmatpush1.bf16.msra.mxu0 %v502
    %520 = vmatprep.subr.bf16.mxu0 0
    %521 = vmatpush1.bf16.msra.mxu0 %v503
    %522 = vmatprep.subr.bf16.mxu0 0
    %523 = vmatpush1.bf16.msra.mxu0 %v504
    %524 = vmatprep.subr.bf16.mxu0 0
    %525 = vmatpush1.bf16.msra.mxu0 %v505
    %526 = vmatprep.subr.bf16.mxu0 0
    %527 = vmatpush1.bf16.msra.mxu0 %v506
    %528 = vmatprep.subr.bf16.mxu0 0
    %529 = vmatpush1.bf16.msra.mxu0 %v507
    %530 = vmatprep.subr.bf16.mxu0 0
    %531 = vmatpush1.bf16.msra.mxu0 %v508
    %532 = vmatprep.subr.bf16.mxu0 0
    %533 = vmatpush1.bf16.msra.mxu0 %v509
    %534 = vmatprep.subr.bf16.mxu0 0
    %535 = vmatpush1.bf16.msra.mxu0 0
    %536 = vmatprep.subr.bf16.mxu0 0
    %537 = vmatpush1.bf16.msra.mxu0 0
    %538 = vmatprep.subr.bf16.mxu0 0
    %539 = vmatpush1.bf16.msra.mxu0 0
    %540 = vmatprep.subr.bf16.mxu0 0
    %541 = vmatpush1.bf16.msra.mxu0 0
    %542 = vmatprep.subr.bf16.mxu0 0
    %543 = vmatpush1.bf16.msra.mxu0 0
    %544 = vmatprep.subr.bf16.mxu0 0
    %545 = vmatpush1.bf16.msra.mxu0 0
    %546 = vmatprep.subr.bf16.mxu0 0
    %547 = vmatpush1.bf16.msra.mxu0 0
    %548 = vmatprep.subr.bf16.mxu0 0
    %549 = vmatpush1.bf16.msra.mxu0 0
    %550 = vmatprep.mubr.bf16.mxu0 0
    %551 = vmatmul.mubr.bf16.gmra.mrb[0].mxu0 %v444
    %v552 = vpop.f32.mrb[0].mxu0
    %v553 = vadd.f32 %v468, %v552
    %v554 = vpop.f32.mrb[0].mxu0
    %v555 = vpop.f32.mrb[0].mxu0
    %v556 = vpop.f32.mrb[0].mxu0
    %557 = vdwg.mxu0
    %v558 = vmax.f32 %v553, 0.0
    %v559 = vpack.c.bf16 %v558, %v558
    %s560 = scalar_lea.vmem [#allocation4], 192
    %v561 = vld [vmem:[%s560] sm:$0xf]
    %v562 = vld [vmem:[%s560 + $0x4] sm:$0xf]
    %v563 = vld [vmem:[%s560 + $0x8] sm:$0xf]
    %v564 = vld [vmem:[%s560 + $0xc] sm:$0xf]
    %v565 = vld [vmem:[%s560 + $0x10] sm:$0xf]
    %v566 = vld [vmem:[%s560 + $0x14] sm:$0xf]
    %v567 = vld [vmem:[%s560 + $0x18] sm:$0xf]
    %v568 = vld [vmem:[%s560 + $0x1c] sm:$0xf]
    %v569 = vld [vmem:[%s560 + $0x20] sm:$0xf]
    %v570 = vld [vmem:[%s560 + $0x24] sm:$0xf]
    %v571 = vld [vmem:[%s560 + $0x28] sm:$0xf]
    %v572 = vld [vmem:[%s560 + $0x2c] sm:$0xf]
    %v573 = vld [vmem:[%s560 + $0x30] sm:$0xf]
    %v574 = vld [vmem:[%s560 + $0x34] sm:$0xf]
    %v575 = vld [vmem:[%s560 + $0x38] sm:$0xf]
    %v576 = vld [vmem:[%s560 + $0x3c] sm:$0xf]
    %s577 = scalar_lea.vmem %s4, 3
    %v578 = vld [vmem:[%s577] sm:$0x1]
    %v580 = vlaneseq
    %v581 = vshrl.u32 %v580, 7
    %v582 = vsub.s32 0, %v581
    %v583 = vrot.slane %v578, %v582
    %v601 = vunpack.c.l.b16 %v561
    %v602 = vunpack.c.l.b16 %v562
    %v603 = vunpack.c.l.b16 %v563
    %v604 = vunpack.c.l.b16 %v564
    %v605 = vunpack.c.l.b16 %v565
    %v606 = vunpack.c.l.b16 %v566
    %v607 = vunpack.c.l.b16 %v567
    %v608 = vunpack.c.l.b16 %v568
    %v609 = vunpack.c.l.b16 %v569
    %v610 = vunpack.c.l.b16 %v570
    %v611 = vunpack.c.l.b16 %v571
    %v612 = vunpack.c.l.b16 %v572
    %v613 = vunpack.c.l.b16 %v573
    %v614 = vunpack.c.l.b16 %v574
    %v615 = vunpack.c.l.b16 %v575
    %v616 = vunpack.c.l.b16 %v576
    %v617 = vpack.c.b16 %v602, %v601
    %v618 = vpack.c.b16 %v604, %v603
    %v619 = vpack.c.b16 %v606, %v605
    %v620 = vpack.c.b16 %v608, %v607
    %v621 = vpack.c.b16 %v610, %v609
    %v622 = vpack.c.b16 %v612, %v611
    %v623 = vpack.c.b16 %v614, %v613
    %v624 = vpack.c.b16 %v616, %v615
    %633 = vmatprep.subr.bf16.mxu0 0
    %634 = vmatpush1.bf16.msra.mxu0 %v617
    %635 = vmatprep.subr.bf16.mxu0 0
    %636 = vmatpush1.bf16.msra.mxu0 %v618
    %637 = vmatprep.subr.bf16.mxu0 0
    %638 = vmatpush1.bf16.msra.mxu0 %v619
    %639 = vmatprep.subr.bf16.mxu0 0
    %640 = vmatpush1.bf16.msra.mxu0 %v620
    %641 = vmatprep.subr.bf16.mxu0 0
    %642 = vmatpush1.bf16.msra.mxu0 %v621
    %643 = vmatprep.subr.bf16.mxu0 0
    %644 = vmatpush1.bf16.msra.mxu0 %v622
    %645 = vmatprep.subr.bf16.mxu0 0
    %646 = vmatpush1.bf16.msra.mxu0 %v623
    %647 = vmatprep.subr.bf16.mxu0 0
    %648 = vmatpush1.bf16.msra.mxu0 %v624
    %649 = vmatprep.subr.bf16.mxu0 0
    %650 = vmatpush1.bf16.msra.mxu0 0
    %651 = vmatprep.subr.bf16.mxu0 0
    %652 = vmatpush1.bf16.msra.mxu0 0
    %653 = vmatprep.subr.bf16.mxu0 0
    %654 = vmatpush1.bf16.msra.mxu0 0
    %655 = vmatprep.subr.bf16.mxu0 0
    %656 = vmatpush1.bf16.msra.mxu0 0
    %657 = vmatprep.subr.bf16.mxu0 0
    %658 = vmatpush1.bf16.msra.mxu0 0
    %659 = vmatprep.subr.bf16.mxu0 0
    %660 = vmatpush1.bf16.msra.mxu0 0
    %661 = vmatprep.subr.bf16.mxu0 0
    %662 = vmatpush1.bf16.msra.mxu0 0
    %663 = vmatprep.subr.bf16.mxu0 0
    %664 = vmatpush1.bf16.msra.mxu0 0
    %665 = vmatprep.mubr.bf16.mxu0 0
    %666 = vmatmul.mubr.bf16.gmra.mrb[0].mxu0 %v559
    %v667 = vpop.f32.mrb[0].mxu0
    %v668 = vadd.f32 %v583, %v667
    %v669 = vpop.f32.mrb[0].mxu0
    %v670 = vpop.f32.mrb[0].mxu0
    %v671 = vpop.f32.mrb[0].mxu0
    %672 = vdwg.mxu0
    %v673 = vmax.f32 %v668, 0.0
    %v674 = vpack.c.bf16 %v673, %v673
    %s675 = scalar_lea.vmem [#allocation4], 256
    %v676 = vld [vmem:[%s675] sm:$0xf]
    %v677 = vld [vmem:[%s675 + $0x4] sm:$0xf]
    %v678 = vld [vmem:[%s675 + $0x8] sm:$0xf]
    %v679 = vld [vmem:[%s675 + $0xc] sm:$0xf]
    %v680 = vld [vmem:[%s675 + $0x10] sm:$0xf]
    %v681 = vld [vmem:[%s675 + $0x14] sm:$0xf]
    %v682 = vld [vmem:[%s675 + $0x18] sm:$0xf]
    %v683 = vld [vmem:[%s675 + $0x1c] sm:$0xf]
    %v684 = vld [vmem:[%s675 + $0x20] sm:$0xf]
    %v685 = vld [vmem:[%s675 + $0x24] sm:$0xf]
    %v686 = vld [vmem:[%s675 + $0x28] sm:$0xf]
    %v687 = vld [vmem:[%s675 + $0x2c] sm:$0xf]
    %v688 = vld [vmem:[%s675 + $0x30] sm:$0xf]
    %v689 = vld [vmem:[%s675 + $0x34] sm:$0xf]
    %v690 = vld [vmem:[%s675 + $0x38] sm:$0xf]
    %v691 = vld [vmem:[%s675 + $0x3c] sm:$0xf]
    %s692 = scalar_lea.vmem %s4, 4
    %v693 = vld [vmem:[%s692] sm:$0x1]
    %v695 = vlaneseq
    %v696 = vshrl.u32 %v695, 7
    %v697 = vsub.s32 0, %v696
    %v698 = vrot.slane %v693, %v697
    %v716 = vunpack.c.l.b16 %v676
    %v717 = vunpack.c.l.b16 %v677
    %v718 = vunpack.c.l.b16 %v678
    %v719 = vunpack.c.l.b16 %v679
    %v720 = vunpack.c.l.b16 %v680
    %v721 = vunpack.c.l.b16 %v681
    %v722 = vunpack.c.l.b16 %v682
    %v723 = vunpack.c.l.b16 %v683
    %v724 = vunpack.c.l.b16 %v684
    %v725 = vunpack.c.l.b16 %v685
    %v726 = vunpack.c.l.b16 %v686
    %v727 = vunpack.c.l.b16 %v687
    %v728 = vunpack.c.l.b16 %v688
    %v729 = vunpack.c.l.b16 %v689
    %v730 = vunpack.c.l.b16 %v690
    %v731 = vunpack.c.l.b16 %v691
    %v732 = vpack.c.b16 %v717, %v716
    %v733 = vpack.c.b16 %v719, %v718
    %v734 = vpack.c.b16 %v721, %v720
    %v735 = vpack.c.b16 %v723, %v722
    %v736 = vpack.c.b16 %v725, %v724
    %v737 = vpack.c.b16 %v727, %v726
    %v738 = vpack.c.b16 %v729, %v728
    %v739 = vpack.c.b16 %v731, %v730
    %748 = vmatprep.subr.bf16.mxu0 0
    %749 = vmatpush1.bf16.msra.mxu0 %v732
    %750 = vmatprep.subr.bf16.mxu0 0
    %751 = vmatpush1.bf16.msra.mxu0 %v733
    %752 = vmatprep.subr.bf16.mxu0 0
    %753 = vmatpush1.bf16.msra.mxu0 %v734
    %754 = vmatprep.subr.bf16.mxu0 0
    %755 = vmatpush1.bf16.msra.mxu0 %v735
    %756 = vmatprep.subr.bf16.mxu0 0
    %757 = vmatpush1.bf16.msra.mxu0 %v736
    %758 = vmatprep.subr.bf16.mxu0 0
    %759 = vmatpush1.bf16.msra.mxu0 %v737
    %760 = vmatprep.subr.bf16.mxu0 0
    %761 = vmatpush1.bf16.msra.mxu0 %v738
    %762 = vmatprep.subr.bf16.mxu0 0
    %763 = vmatpush1.bf16.msra.mxu0 %v739
    %764 = vmatprep.subr.bf16.mxu0 0
    %765 = vmatpush1.bf16.msra.mxu0 0
    %766 = vmatprep.subr.bf16.mxu0 0
    %767 = vmatpush1.bf16.msra.mxu0 0
    %768 = vmatprep.subr.bf16.mxu0 0
    %769 = vmatpush1.bf16.msra.mxu0 0
    %770 = vmatprep.subr.bf16.mxu0 0
    %771 = vmatpush1.bf16.msra.mxu0 0
    %772 = vmatprep.subr.bf16.mxu0 0
    %773 = vmatpush1.bf16.msra.mxu0 0
    %774 = vmatprep.subr.bf16.mxu0 0
    %775 = vmatpush1.bf16.msra.mxu0 0
    %776 = vmatprep.subr.bf16.mxu0 0
    %777 = vmatpush1.bf16.msra.mxu0 0
    %778 = vmatprep.subr.bf16.mxu0 0
    %779 = vmatpush1.bf16.msra.mxu0 0
    %780 = vmatprep.mubr.bf16.mxu0 0
    %781 = vmatmul.mubr.bf16.gmra.mrb[0].mxu0 %v674
    %v782 = vpop.f32.mrb[0].mxu0
    %v783 = vadd.f32 %v698, %v782
    %v784 = vpop.f32.mrb[0].mxu0
    %v785 = vpop.f32.mrb[0].mxu0
    %v786 = vpop.f32.mrb[0].mxu0
    %787 = vdwg.mxu0
    %v788 = vmax.f32 %v783, 0.0
    %v789 = vpack.c.bf16 %v788, %v788
    %s790 = scalar_lea.vmem [#allocation4], 320
    %v791 = vld [vmem:[%s790] sm:$0xf]
    %v792 = vld [vmem:[%s790 + $0x4] sm:$0xf]
    %v793 = vld [vmem:[%s790 + $0x8] sm:$0xf]
    %v794 = vld [vmem:[%s790 + $0xc] sm:$0xf]
    %v795 = vld [vmem:[%s790 + $0x10] sm:$0xf]
    %v796 = vld [vmem:[%s790 + $0x14] sm:$0xf]
    %v797 = vld [vmem:[%s790 + $0x18] sm:$0xf]
    %v798 = vld [vmem:[%s790 + $0x1c] sm:$0xf]
    %v799 = vld [vmem:[%s790 + $0x20] sm:$0xf]
    %v800 = vld [vmem:[%s790 + $0x24] sm:$0xf]
    %v801 = vld [vmem:[%s790 + $0x28] sm:$0xf]
    %v802 = vld [vmem:[%s790 + $0x2c] sm:$0xf]
    %v803 = vld [vmem:[%s790 + $0x30] sm:$0xf]
    %v804 = vld [vmem:[%s790 + $0x34] sm:$0xf]
    %v805 = vld [vmem:[%s790 + $0x38] sm:$0xf]
    %v806 = vld [vmem:[%s790 + $0x3c] sm:$0xf]
    %s807 = scalar_lea.vmem %s4, 5
    %v808 = vld [vmem:[%s807] sm:$0x1]
    %v810 = vlaneseq
    %v811 = vshrl.u32 %v810, 7
    %v812 = vsub.s32 0, %v811
    %v813 = vrot.slane %v808, %v812
    %v831 = vunpack.c.l.b16 %v791
    %v832 = vunpack.c.l.b16 %v792
    %v833 = vunpack.c.l.b16 %v793
    %v834 = vunpack.c.l.b16 %v794
    %v835 = vunpack.c.l.b16 %v795
    %v836 = vunpack.c.l.b16 %v796
    %v837 = vunpack.c.l.b16 %v797
    %v838 = vunpack.c.l.b16 %v798
    %v839 = vunpack.c.l.b16 %v799
    %v840 = vunpack.c.l.b16 %v800
    %v841 = vunpack.c.l.b16 %v801
    %v842 = vunpack.c.l.b16 %v802
    %v843 = vunpack.c.l.b16 %v803
    %v844 = vunpack.c.l.b16 %v804
    %v845 = vunpack.c.l.b16 %v805
    %v846 = vunpack.c.l.b16 %v806
    %v847 = vpack.c.b16 %v832, %v831
    %v848 = vpack.c.b16 %v834, %v833
    %v849 = vpack.c.b16 %v836, %v835
    %v850 = vpack.c.b16 %v838, %v837
    %v851 = vpack.c.b16 %v840, %v839
    %v852 = vpack.c.b16 %v842, %v841
    %v853 = vpack.c.b16 %v844, %v843
    %v854 = vpack.c.b16 %v846, %v845
    %863 = vmatprep.subr.bf16.mxu0 0
    %864 = vmatpush1.bf16.msra.mxu0 %v847
    %865 = vmatprep.subr.bf16.mxu0 0
    %866 = vmatpush1.bf16.msra.mxu0 %v848
    %867 = vmatprep.subr.bf16.mxu0 0
    %868 = vmatpush1.bf16.msra.mxu0 %v849
    %869 = vmatprep.subr.bf16.mxu0 0
    %870 = vmatpush1.bf16.msra.mxu0 %v850
    %871 = vmatprep.subr.bf16.mxu0 0
    %872 = vmatpush1.bf16.msra.mxu0 %v851
    %873 = vmatprep.subr.bf16.mxu0 0
    %874 = vmatpush1.bf16.msra.mxu0 %v852
    %875 = vmatprep.subr.bf16.mxu0 0
    %876 = vmatpush1.bf16.msra.mxu0 %v853
    %877 = vmatprep.subr.bf16.mxu0 0
    %878 = vmatpush1.bf16.msra.mxu0 %v854
    %879 = vmatprep.subr.bf16.mxu0 0
    %880 = vmatpush1.bf16.msra.mxu0 0
    %881 = vmatprep.subr.bf16.mxu0 0
    %882 = vmatpush1.bf16.msra.mxu0 0
    %883 = vmatprep.subr.bf16.mxu0 0
    %884 = vmatpush1.bf16.msra.mxu0 0
    %885 = vmatprep.subr.bf16.mxu0 0
    %886 = vmatpush1.bf16.msra.mxu0 0
    %887 = vmatprep.subr.bf16.mxu0 0
    %888 = vmatpush1.bf16.msra.mxu0 0
    %889 = vmatprep.subr.bf16.mxu0 0
    %890 = vmatpush1.bf16.msra.mxu0 0
    %891 = vmatprep.subr.bf16.mxu0 0
    %892 = vmatpush1.bf16.msra.mxu0 0
    %893 = vmatprep.subr.bf16.mxu0 0
    %894 = vmatpush1.bf16.msra.mxu0 0
    %895 = vmatprep.mubr.bf16.mxu0 0
    %896 = vmatmul.mubr.bf16.gmra.mrb[0].mxu0 %v789
    %v897 = vpop.f32.mrb[0].mxu0
    %v898 = vadd.f32 %v813, %v897
    %v899 = vpop.f32.mrb[0].mxu0
    %v900 = vpop.f32.mrb[0].mxu0
    %v901 = vpop.f32.mrb[0].mxu0
    %902 = vdwg.mxu0
    %v903 = vmax.f32 %v898, 0.0
    %v904 = vpack.c.bf16 %v903, %v903
    %v905 = vld [vmem:[%s5] sm:$0xf]
    %v906 = vld [vmem:[%s5 + $0x4] sm:$0xf]
    %v907 = vld [vmem:[%s5 + $0x8] sm:$0xf]
    %v908 = vld [vmem:[%s5 + $0xc] sm:$0xf]
    %v909 = vld [vmem:[%s5 + $0x10] sm:$0xf]
    %v910 = vld [vmem:[%s5 + $0x14] sm:$0xf]
    %v911 = vld [vmem:[%s5 + $0x18] sm:$0xf]
    %v912 = vld [vmem:[%s5 + $0x1c] sm:$0xf]
    %v913 = vld [vmem:[%s5 + $0x20] sm:$0xf]
    %v914 = vld [vmem:[%s5 + $0x24] sm:$0xf]
    %v915 = vld [vmem:[%s5 + $0x28] sm:$0xf]
    %v916 = vld [vmem:[%s5 + $0x2c] sm:$0xf]
    %v917 = vld [vmem:[%s5 + $0x30] sm:$0xf]
    %v918 = vld [vmem:[%s5 + $0x34] sm:$0xf]
    %v919 = vld [vmem:[%s5 + $0x38] sm:$0xf]
    %v920 = vld [vmem:[%s5 + $0x3c] sm:$0xf]
    %v921 = vld [vmem:[%s6] sm:$0x1]
    %v923 = vlaneseq
    %v924 = vshrl.u32 %v923, 7
    %v925 = vsub.s32 0, %v924
    %v926 = vrot.slane %v921, %v925
    %v944 = vunpack.c.l.b16 %v905
    %v945 = vunpack.c.l.b16 %v906
    %v946 = vunpack.c.l.b16 %v907
    %v947 = vunpack.c.l.b16 %v908
    %v948 = vunpack.c.l.b16 %v909
    %v949 = vunpack.c.l.b16 %v910
    %v950 = vunpack.c.l.b16 %v911
    %v951 = vunpack.c.l.b16 %v912
    %v952 = vunpack.c.l.b16 %v913
    %v953 = vunpack.c.l.b16 %v914
    %v954 = vunpack.c.l.b16 %v915
    %v955 = vunpack.c.l.b16 %v916
    %v956 = vunpack.c.l.b16 %v917
    %v957 = vunpack.c.l.b16 %v918
    %v958 = vunpack.c.l.b16 %v919
    %v959 = vunpack.c.l.b16 %v920
    %v960 = vpack.c.b16 %v945, %v944
    %v961 = vpack.c.b16 %v947, %v946
    %v962 = vpack.c.b16 %v949, %v948
    %v963 = vpack.c.b16 %v951, %v950
    %v964 = vpack.c.b16 %v953, %v952
    %v965 = vpack.c.b16 %v955, %v954
    %v966 = vpack.c.b16 %v957, %v956
    %v967 = vpack.c.b16 %v959, %v958
    %976 = vmatprep.subr.bf16.mxu0 0
    %977 = vmatpush1.bf16.msra.mxu0 %v960
    %978 = vmatprep.subr.bf16.mxu0 0
    %979 = vmatpush1.bf16.msra.mxu0 %v961
    %980 = vmatprep.subr.bf16.mxu0 0
    %981 = vmatpush1.bf16.msra.mxu0 %v962
    %982 = vmatprep.subr.bf16.mxu0 0
    %983 = vmatpush1.bf16.msra.mxu0 %v963
    %984 = vmatprep.subr.bf16.mxu0 0
    %985 = vmatpush1.bf16.msra.mxu0 %v964
    %986 = vmatprep.subr.bf16.mxu0 0
    %987 = vmatpush1.bf16.msra.mxu0 %v965
    %988 = vmatprep.subr.bf16.mxu0 0
    %989 = vmatpush1.bf16.msra.mxu0 %v966
    %990 = vmatprep.subr.bf16.mxu0 0
    %991 = vmatpush1.bf16.msra.mxu0 %v967
    %992 = vmatprep.subr.bf16.mxu0 0
    %993 = vmatpush1.bf16.msra.mxu0 0
    %994 = vmatprep.subr.bf16.mxu0 0
    %995 = vmatpush1.bf16.msra.mxu0 0
    %996 = vmatprep.subr.bf16.mxu0 0
    %997 = vmatpush1.bf16.msra.mxu0 0
    %998 = vmatprep.subr.bf16.mxu0 0
    %999 = vmatpush1.bf16.msra.mxu0 0
    %1000 = vmatprep.subr.bf16.mxu0 0
    %1001 = vmatpush1.bf16.msra.mxu0 0
    %1002 = vmatprep.subr.bf16.mxu0 0
    %1003 = vmatpush1.bf16.msra.mxu0 0
    %1004 = vmatprep.subr.bf16.mxu0 0
    %1005 = vmatpush1.bf16.msra.mxu0 0
    %1006 = vmatprep.subr.bf16.mxu0 0
    %1007 = vmatpush1.bf16.msra.mxu0 0
    %1008 = vmatprep.mubr.bf16.mxu0 0
    %1009 = vmatmul.mubr.bf16.gmra.mrb[0].mxu0 %v904
    %v1010 = vpop.f32.mrb[0].mxu0
    %v1011 = vadd.f32 %v926, %v1010
    %v1012 = vpop.f32.mrb[0].mxu0
    %v1013 = vpop.f32.mrb[0].mxu0
    %v1014 = vpop.f32.mrb[0].mxu0
    %1015 = vdwg.mxu0
    %vm1016 = vcmask 64512
    %1017 = vst.msk [vmem:[%s7] sm:$0xff] %vm1016, %v1011
    // Predicated region
    $region38: #{fnn_forward.1} parent=1 // pred_check
      _
    $region39: #{fnn_forward.1} parent=1 // pred_check_branch
      %1019 = sbr.rel (0) target = $region41
    $region40: #{fnn_forward.1} parent=1 // pred_region
      _
    $region41: #{fnn_forward.1} parent=1 // pred_fallthru
      _
    // Predicated region
    $region42: #{fnn_forward.1} parent=1 // pred_check
      _
    $region43: #{fnn_forward.1} parent=1 // pred_check_branch
      %1021 = sbr.rel (0) target = $region45
    $region44: #{fnn_forward.1} parent=1 // pred_region
      _
    $region45: #{fnn_forward.1} parent=1 // pred_fallthru
      _
    %1022 = vsyncpa [#allocation3], 1
    %1023 = vsyncpa [#allocation5], 1

</llo_original>
